<compile_context>
chip_gen: v7x
topology: tpu7x:2x2x1
jax: 0.10.0
libtpu: 0.0.40
codegen_flags: <defaults>
</compile_context>

<pallas_src>
from functools import partial

import jax
import jax.numpy as jnp
from jax import lax
from jax.experimental import pallas as pl
from jax.experimental.pallas import tpu as pltpu

# Small, module-consistent shapes.
N, C_IN, H, W = 2, 4, 16, 16
C_OUT = 8
HIDDEN = 32
KH = KW = 3
NTAPS = KH * KW
K_CONV = NTAPS * C_IN          # 36  conv contraction dim (taps folded in)
HW = H * W                     # 256
NHW = N * HW                   # 512 lane dim of the conv GEMM (4 x 128, dense)
OUT_DIM = 1                    # regression head width

# Packed output slab: one full (8, 128) f32 vreg -> single unmasked store.
OUT_ROWS = 8
OUT_LANES = 128
LOSS_LANE = 64                 # lanes [LOSS_LANE, 128) carry the broadcast loss

# Parameter slab layout: one lane-dense (SLAB_ROWS, 128) input instead of ~7 tiny
# DMAs.  Every block starts on an 8-row (sublane-tile) boundary.
SLAB_LANES = 128
ROW_W1 = 0      # (C_OUT, K_CONV)    conv weights, transposed (tap-major/chan-minor K)
ROW_B1 = 8      # (C_OUT, 1)         conv bias column
ROW_FW1 = 16    # (HIDDEN, C_OUT)    fc1 weights, transposed
ROW_FB1 = 48    # (HIDDEN, 1)        fc1 bias column
ROW_FW2 = 80    # (OUT_DIM, HIDDEN)  fc2 weights, transposed
ROW_FB2 = 88    # (OUT_DIM, 1)       fc2 bias column
ROW_TGT = 96    # (OUT_DIM, N)       target (zeros when returnLoss=False)
SLAB_ROWS = 104


def _make_kernel(compute_loss):
    """Build the forward kernel; `compute_loss` selects the returnLoss=True variant."""

    def kernel(patches_ref, slab_ref, out_ref):
        # patches_ref : (K_CONV, NHW)      im2col patches, NHW in lanes (dense)
        # slab_ref    : (SLAB_ROWS, 128)   packed parameters (+ target)
        # out_ref     : (OUT_ROWS, 128)    packed lane-dense output slab

        # ---- 3x3 SAME conv: 9 taps folded into K -> one MXU matmul, dense lanes ----
        w1 = slab_ref[ROW_W1:ROW_W1 + C_OUT, 0:K_CONV]                  # (C_OUT, K_CONV)
        b1 = slab_ref[ROW_B1:ROW_B1 + C_OUT, 0:1]                       # (C_OUT, 1)
        acc = jnp.dot(w1, patches_ref[...],
                      preferred_element_type=jnp.float32)               # (C_OUT, NHW)
        acc = jnp.maximum(acc + b1, 0.0)                                # bias + ReLU

        # ---- global average pool: per-image static lane-range XLU reductions ----
        cols = [jnp.sum(acc[:, n * HW:(n + 1) * HW], axis=1, keepdims=True)
                for n in range(N)]
        pooled = jnp.concatenate(cols, axis=1) * jnp.float32(1.0 / HW)  # (C_OUT, N)

        # ---- MLP head, kept in the transposed layout (batch N stays in lanes) ----
        fw1 = slab_ref[ROW_FW1:ROW_FW1 + HIDDEN, 0:C_OUT]               # (HIDDEN, C_OUT)
        fb1 = slab_ref[ROW_FB1:ROW_FB1 + HIDDEN, 0:1]                   # (HIDDEN, 1)
        h = jnp.maximum(
            jnp.dot(fw1, pooled, preferred_element_type=jnp.float32) + fb1, 0.0)
        fw2 = slab_ref[ROW_FW2:ROW_FW2 + OUT_DIM, 0:HIDDEN]             # (OUT_DIM, HIDDEN)
        fb2 = slab_ref[ROW_FB2:ROW_FB2 + OUT_DIM, 0:1]                  # (OUT_DIM, 1)
        y_t = jnp.dot(fw2, h, preferred_element_type=jnp.float32) + fb2  # (OUT_DIM, N)

        # ---- pack y (+ loss) into one full (8,128) vreg; single unmasked store ----
        y_rows = jnp.concatenate(
            [y_t, jnp.zeros((OUT_DIM, OUT_LANES - N), jnp.float32)], axis=1)
        slab_out = jnp.concatenate(
            [y_rows, jnp.zeros((OUT_ROWS - OUT_DIM, OUT_LANES), jnp.float32)], axis=0)

        if compute_loss:
            # MSE with mean reduction over all N*OUT_DIM elements.
            tgt = slab_ref[ROW_TGT:ROW_TGT + OUT_DIM, 0:N]              # (OUT_DIM, N)
            diff = y_t - tgt
            loss2d = jnp.sum(jnp.sum(diff * diff, axis=1, keepdims=True),
                             axis=0, keepdims=True) * jnp.float32(
                                 1.0 / (N * OUT_DIM))                   # (1, 1)
            lane = lax.broadcasted_iota(jnp.int32, (OUT_ROWS, OUT_LANES), 1)
            slab_out = jnp.where(lane >= LOSS_LANE, loss2d, slab_out)

        out_ref[...] = slab_out

    return kernel


# Memoized kernel closures (no per-call rebuilding).
_KERNELS = {False: _make_kernel(False), True: _make_kernel(True)}


def _full_spec(shape):
    nd = len(shape)
    return pl.BlockSpec(shape, lambda i, nd=nd: (0,) * nd)


def _pallas_forward(patches_t, slab, compute_loss):
    return pl.pallas_call(
        _KERNELS[compute_loss],
        grid=(1,),
        in_specs=[_full_spec(patches_t.shape), _full_spec(slab.shape)],
        out_specs=_full_spec((OUT_ROWS, OUT_LANES)),
        out_shape=jax.ShapeDtypeStruct((OUT_ROWS, OUT_LANES), jnp.float32),
        compiler_params=pltpu.CompilerParams(dimension_semantics=("arbitrary",)),
    )(patches_t, slab)


def _im2col_t(img_nchw):
    """NCHW -> SAME-pad -> fold 9 taps into K -> transpose so NHW is the lane dim."""
    x = jnp.transpose(img_nchw.astype(jnp.float32), (0, 2, 3, 1))        # (N, H, W, C)
    xp = jnp.pad(x, ((0, 0), (1, 1), (1, 1), (0, 0)))                    # (N, H+2, W+2, C)
    taps = [xp[:, kh:kh + H, kw:kw + W, :]
            for kh in range(KH) for kw in range(KW)]                     # 9 x (N,H,W,C)
    patches = jnp.concatenate(taps, axis=-1)                             # col = tap*C + c
    return patches.reshape(NHW, K_CONV).T                                # (K_CONV, NHW)


def _blk(a, rows):
    r, c = a.shape
    return jnp.pad(a.astype(jnp.float32), ((0, rows - r), (0, SLAB_LANES - c)))


def _pack_slab(params, tgt_t):
    """Pack all parameters (+ target) into one lane-dense (SLAB_ROWS, 128) slab."""
    w1_t = params["w1"].reshape(K_CONV, C_OUT).T                         # (C_OUT, K_CONV)
    return jnp.concatenate([
        _blk(w1_t, 8),                                                   # rows [0, 8)
        _blk(params["b1"].reshape(C_OUT, 1), 8),                         # rows [8, 16)
        _blk(params["fw1"].T, 32),                                       # rows [16, 48)
        _blk(params["fb1"].reshape(HIDDEN, 1), 32),                      # rows [48, 80)
        _blk(params["fw2"].T, 8),                                        # rows [80, 88)
        _blk(params["fb2"].reshape(OUT_DIM, 1), 8),                      # rows [88, 96)
        _blk(tgt_t, 8),                                                  # rows [96, 104)
    ], axis=0)


@partial(jax.jit, static_argnames=("returnLoss",))
def _forward_jit(img, params, target, returnLoss):
    patches_t = _im2col_t(img)
    if returnLoss:
        tgt_t = target.astype(jnp.float32).reshape(N, OUT_DIM).T         # (OUT_DIM, N)
    else:
        tgt_t = jnp.zeros((OUT_DIM, N), jnp.float32)
    slab = _pack_slab(params, tgt_t)
    out = _pallas_forward(patches_t, slab, returnLoss)
    y = out[0:OUT_DIM, 0:N].T                                            # (N, OUT_DIM)
    if returnLoss:
        return y, out[0, LOSS_LANE]
    return y


def trainer_forward(x, params, returnLoss=False):
    """Mirrors Trainer.forward -> TrainerPart.forward (incl. the float() _convert)."""
    img = x["input"]["img"]
    if returnLoss:
        return _forward_jit(img, params, x["target"]["num"], returnLoss=True)
    return _forward_jit(img, params, None, returnLoss=False)


def _reference_forward(img_nchw, params, target):
    """Pure-JAX reference (independent conv path) for a sanity check."""
    w_oihw = jnp.transpose(params["w1"].reshape(KH, KW, C_IN, C_OUT), (3, 2, 0, 1))
    conv = lax.conv_general_dilated(
        img_nchw.astype(jnp.float32), w_oihw, window_strides=(1, 1), padding="SAME",
        dimension_numbers=("NCHW", "OIHW", "NCHW"))
    conv = jnp.maximum(conv + params["b1"].reshape(1, C_OUT, 1, 1), 0.0)
    pooled = conv.mean(axis=(2, 3))                                      # (N, C_OUT)
    h = jnp.maximum(pooled @ params["fw1"] + params["fb1"], 0.0)
    y = h @ params["fw2"] + params["fb2"]
    loss = jnp.mean((y - target) ** 2)
    return y, loss


if __name__ == "__main__":
    key = jax.random.PRNGKey(0)
    ks = jax.random.split(key, 8)
    params = {
        "w1":  0.1 * jax.random.normal(ks[0], (NTAPS, C_IN, C_OUT), jnp.float32),
        "b1":  0.1 * jax.random.normal(ks[1], (1, C_OUT), jnp.float32),
        "fw1": 0.1 * jax.random.normal(ks[2], (C_OUT, HIDDEN), jnp.float32),
        "fb1": 0.1 * jax.random.normal(ks[3], (1, HIDDEN), jnp.float32),
        "fw2": 0.1 * jax.random.normal(ks[4], (HIDDEN, OUT_DIM), jnp.float32),
        "fb2": 0.1 * jax.random.normal(ks[5], (1, OUT_DIM), jnp.float32),
    }

    x = {
        "input":  {"img": jax.random.normal(ks[6], (N, C_IN, H, W), jnp.float32)},
        "target": {"num": jax.random.normal(ks[7], (N, OUT_DIM), jnp.float32)},
    }

    # returnLoss=True path (training/test forward).
    y, loss = trainer_forward(x, params, returnLoss=True)
    y = jax.block_until_ready(y)
    loss = jax.block_until_ready(loss)

    # returnLoss=False path (inference; loss math + target packing skipped in-kernel).
    y_infer = jax.block_until_ready(trainer_forward(x, params, returnLoss=False))

    y_ref, loss_ref = _reference_forward(x["input"]["img"], params,
                                         x["target"]["num"].reshape(N, OUT_DIM))
    assert y.shape == (N, OUT_DIM) and loss.shape == ()
    assert jnp.allclose(y, y_ref, atol=1e-4, rtol=1e-4)
    assert jnp.allclose(y_infer, y_ref, atol=1e-4, rtol=1e-4)
    assert jnp.allclose(loss, loss_ref, atol=1e-4, rtol=1e-4)

    print("KERNEL_OK")
</pallas_src>

<mosaic_0001>
module attributes {stable_mosaic.version = 11 : i64} {
  func.func @kernel(%arg0: i32, %arg1: memref<36x512xf32, #tpu.memory_space<vmem>>, %arg2: memref<104x128xf32, #tpu.memory_space<vmem>>, %arg3: memref<8x128xf32, #tpu.memory_space<vmem>>) attributes {dimension_semantics = [#tpu.dimension_semantics<arbitrary>], iteration_bounds = array<i64: 1>, scalar_prefetch = 0 : i64, scratch_operands = 0 : i64, tpu.core_type = #tpu.core_type<tc>, window_params = [{pipeline_mode = #tpu.pipeline_mode<synchronous>, transform_indices = @transform_0, window_bounds = array<i64: 36, 512>}, {pipeline_mode = #tpu.pipeline_mode<synchronous>, transform_indices = @transform_1, window_bounds = array<i64: 104, 128>}, {pipeline_mode = #tpu.pipeline_mode<synchronous>, transform_indices = @transform_2, window_bounds = array<i64: 8, 128>}]} {
    %c0 = arith.constant 0 : index
    %c0_0 = arith.constant 0 : index
    %0 = vector.load %arg2[%c0, %c0_0] : memref<104x128xf32, #tpu.memory_space<vmem>>, vector<8x36xf32>
    %c8 = arith.constant 8 : index
    %c0_1 = arith.constant 0 : index
    %1 = vector.load %arg2[%c8, %c0_1] : memref<104x128xf32, #tpu.memory_space<vmem>>, vector<8x1xf32>
    %c0_2 = arith.constant 0 : index
    %c0_3 = arith.constant 0 : index
    %2 = vector.load %arg1[%c0_2, %c0_3] : memref<36x512xf32, #tpu.memory_space<vmem>>, vector<36x512xf32>
    %cst = arith.constant dense<0.000000e+00> : vector<8x512xf32>
    %3 = tpu.matmul %0, %2, %cst {dimension_numbers = #tpu.dot_dimension_numbers<[1], [0], [0], [1], [0, 0, 1, 1], [], []>} : vector<8x36xf32>, vector<36x512xf32>, vector<8x512xf32> -> vector<8x512xf32>
    %4 = vector.broadcast %1 : vector<8x1xf32> to vector<8x512xf32>
    %5 = arith.addf %3, %4 : vector<8x512xf32>
    %cst_4 = arith.constant 0.000000e+00 : f32
    %6 = vector.broadcast %cst_4 : f32 to vector<8x512xf32>
    %7 = arith.maximumf %5, %6 : vector<8x512xf32>
    %8 = vector.extract_strided_slice %7 {offsets = [0, 0], sizes = [8, 256], strides = [1, 1]} : vector<8x512xf32> to vector<8x256xf32>
    %cst_5 = arith.constant dense<0.000000e+00> : vector<8xf32>
    %9 = vector.multi_reduction <add>, %8, %cst_5 [1] : vector<8x256xf32> to vector<8xf32>
    %10 = vector.shape_cast %9 : vector<8xf32> to vector<8x1xf32>
    %11 = vector.extract_strided_slice %7 {offsets = [0, 256], sizes = [8, 256], strides = [1, 1]} : vector<8x512xf32> to vector<8x256xf32>
    %cst_6 = arith.constant dense<0.000000e+00> : vector<8xf32>
    %12 = vector.multi_reduction <add>, %11, %cst_6 [1] : vector<8x256xf32> to vector<8xf32>
    %13 = vector.shape_cast %12 : vector<8xf32> to vector<8x1xf32>
    %14 = tpu.concatenate %10, %13 in 1 : vector<8x1xf32>, vector<8x1xf32> -> vector<8x2xf32>
    %cst_7 = arith.constant 3.906250e-03 : f32
    %15 = vector.broadcast %cst_7 : f32 to vector<8x2xf32>
    %16 = arith.mulf %14, %15 : vector<8x2xf32>
    %c16 = arith.constant 16 : index
    %c0_8 = arith.constant 0 : index
    %17 = vector.load %arg2[%c16, %c0_8] : memref<104x128xf32, #tpu.memory_space<vmem>>, vector<32x8xf32>
    %c48 = arith.constant 48 : index
    %c0_9 = arith.constant 0 : index
    %18 = vector.load %arg2[%c48, %c0_9] : memref<104x128xf32, #tpu.memory_space<vmem>>, vector<32x1xf32>
    %cst_10 = arith.constant dense<0.000000e+00> : vector<32x2xf32>
    %19 = tpu.matmul %17, %16, %cst_10 {dimension_numbers = #tpu.dot_dimension_numbers<[1], [0], [0], [1], [0, 0, 1, 1], [], []>} : vector<32x8xf32>, vector<8x2xf32>, vector<32x2xf32> -> vector<32x2xf32>
    %20 = vector.broadcast %18 : vector<32x1xf32> to vector<32x2xf32>
    %21 = arith.addf %19, %20 : vector<32x2xf32>
    %cst_11 = arith.constant 0.000000e+00 : f32
    %22 = vector.broadcast %cst_11 : f32 to vector<32x2xf32>
    %23 = arith.maximumf %21, %22 : vector<32x2xf32>
    %c80 = arith.constant 80 : index
    %c0_12 = arith.constant 0 : index
    %24 = vector.load %arg2[%c80, %c0_12] : memref<104x128xf32, #tpu.memory_space<vmem>>, vector<1x32xf32>
    %c88 = arith.constant 88 : index
    %c0_13 = arith.constant 0 : index
    %25 = vector.load %arg2[%c88, %c0_13] : memref<104x128xf32, #tpu.memory_space<vmem>>, vector<1x1xf32>
    %cst_14 = arith.constant dense<0.000000e+00> : vector<1x2xf32>
    %26 = tpu.matmul %24, %23, %cst_14 {dimension_numbers = #tpu.dot_dimension_numbers<[1], [0], [0], [1], [0, 0, 1, 1], [], []>} : vector<1x32xf32>, vector<32x2xf32>, vector<1x2xf32> -> vector<1x2xf32>
    %27 = vector.broadcast %25 : vector<1x1xf32> to vector<1x2xf32>
    %28 = arith.addf %26, %27 : vector<1x2xf32>
    %cst_15 = arith.constant 0.000000e+00 : f32
    %29 = vector.broadcast %cst_15 : f32 to vector<1x126xf32>
    %30 = tpu.concatenate %28, %29 in 1 : vector<1x2xf32>, vector<1x126xf32> -> vector<1x128xf32>
    %cst_16 = arith.constant 0.000000e+00 : f32
    %31 = vector.broadcast %cst_16 : f32 to vector<7x128xf32>
    %32 = tpu.concatenate %30, %31 in 0 : vector<1x128xf32>, vector<7x128xf32> -> vector<8x128xf32>
    %c96 = arith.constant 96 : index
    %c0_17 = arith.constant 0 : index
    %33 = vector.load %arg2[%c96, %c0_17] : memref<104x128xf32, #tpu.memory_space<vmem>>, vector<1x2xf32>
    %34 = arith.subf %28, %33 : vector<1x2xf32>
    %35 = arith.mulf %34, %34 : vector<1x2xf32>
    %cst_18 = arith.constant dense<0.000000e+00> : vector<1xf32>
    %36 = vector.multi_reduction <add>, %35, %cst_18 [1] : vector<1x2xf32> to vector<1xf32>
    %37 = vector.shape_cast %36 : vector<1xf32> to vector<1x1xf32>
    %cst_19 = arith.constant dense<0.000000e+00> : vector<1xf32>
    %38 = vector.multi_reduction <add>, %37, %cst_19 [0] : vector<1x1xf32> to vector<1xf32>
    %39 = vector.shape_cast %38 : vector<1xf32> to vector<1x1xf32>
    %cst_20 = arith.constant 5.000000e-01 : f32
    %40 = vector.broadcast %cst_20 : f32 to vector<1x1xf32>
    %41 = arith.mulf %39, %40 : vector<1x1xf32>
    %42 = tpu.iota {dimensions = array<i32: 1>} : vector<8x128xi32>
    %c64_i32 = arith.constant 64 : i32
    %43 = vector.broadcast %c64_i32 : i32 to vector<8x128xi32>
    %44 = arith.cmpi sge, %42, %43 : vector<8x128xi32>
    %45 = vector.shape_cast %41 : vector<1x1xf32> to vector<1x1xf32>
    %46 = vector.broadcast %45 : vector<1x1xf32> to vector<8x128xf32>
    %47 = arith.select %44, %46, %32 : vector<8x128xi1>, vector<8x128xf32>
    %c0_21 = arith.constant 0 : index
    %c0_22 = arith.constant 0 : index
    %48 = vector.load %arg3[%c0_21, %c0_22] : memref<8x128xf32, #tpu.memory_space<vmem>>, vector<8x128xf32>
    tpu.vector_store %arg3[%c0_21, %c0_22], %47 {strides = array<i32>} : memref<8x128xf32, #tpu.memory_space<vmem>>, vector<8x128xf32>,
    return
  }
  func.func @transform_0(%arg0: i32) -> (i32, i32) {
    %c0_i32 = arith.constant 0 : i32
    %c0_i32_0 = arith.constant 0 : i32
    %c0_i32_1 = arith.constant 0 : i32
    return %c0_i32, %c0_i32_0 : i32, i32
  }
  func.func @transform_1(%arg0: i32) -> (i32, i32) {
    %c0_i32 = arith.constant 0 : i32
    %c0_i32_0 = arith.constant 0 : i32
    %c0_i32_1 = arith.constant 0 : i32
    return %c0_i32, %c0_i32_0 : i32, i32
  }
  func.func @transform_2(%arg0: i32) -> (i32, i32) {
    %c0_i32 = arith.constant 0 : i32
    %c0_i32_0 = arith.constant 0 : i32
    %c0_i32_1 = arith.constant 0 : i32
    return %c0_i32, %c0_i32_0 : i32, i32
  }
}

</mosaic_0001>

<llo_original>
// kernel: _forward_jit.1
$region0: #{_forward_jit.1}
  #allocation0 [shape = 'u32[]', space=smem, size = 0x4, offset = 0x4, fixed_abs, tag = 'smem constant byte address 0x4 - core index']
  #allocation1 [shape = 'u32[144,128]{1,0:T(1,128)}', space=vmem, size = 0x12000, scoped, tag = 'internal scratch']
  %s0 = inlined_call_operand.vmem [shape: f32[36,512], index: 0, kind: input, shape index: {}]
  %s1 = inlined_call_operand.vmem [shape: f32[104,128], index: 1, kind: input, shape index: {}]
  %s2 = inlined_call_operand.vmem [shape: f32[8,128], index: 2, kind: output, shape index: {}]
  %s3 = sld [smem:[#allocation0]]
  $region18: #{_forward_jit.1} parent=0
    _
  %s5 = ssub.s32 1, %s3
  %s6 = scalar_select 0, %s5, %s3
  // Predicated region
  $region2: #{_forward_jit.1} parent=0 // pred_check
    _
  $region3: #{_forward_jit.1} parent=0 // pred_check_branch
    %8 = sbr.rel (0) target = $region5
  $region4: #{_forward_jit.1} parent=0 // pred_region
    _
  $region5: #{_forward_jit.1} parent=0 // pred_fallthru
    _
  // Predicated region
  $region6: #{_forward_jit.1} parent=0 // pred_check
    _
  $region7: #{_forward_jit.1} parent=0 // pred_check_branch
    %10 = sbr.rel (0) target = $region9
  $region8: #{_forward_jit.1} parent=0 // pred_region
    _
  $region9: #{_forward_jit.1} parent=0 // pred_fallthru
    _
  %v11 = vld [vmem:[%s1] sm:$0xff]
  %v12 = vld [vmem:[%s1 + $0x8] sm:$0xff]
  %v13 = vld [vmem:[%s0] sm:$0xff]
  %v14 = vld [vmem:[%s0 + $0x8] sm:$0xff]
  %v15 = vld [vmem:[%s0 + $0x10] sm:$0xff]
  %v16 = vld [vmem:[%s0 + $0x18] sm:$0xff]
  %v17 = vld [vmem:[%s0 + $0x20] sm:$0xff]
  %v18 = vld [vmem:[%s0 + $0x28] sm:$0xff]
  %v19 = vld [vmem:[%s0 + $0x30] sm:$0xff]
  %v20 = vld [vmem:[%s0 + $0x38] sm:$0xff]
  %v21 = vld [vmem:[%s0 + $0x40] sm:$0xff]
  %v22 = vld [vmem:[%s0 + $0x48] sm:$0xff]
  %v23 = vld [vmem:[%s0 + $0x50] sm:$0xff]
  %v24 = vld [vmem:[%s0 + $0x58] sm:$0xff]
  %v25 = vld [vmem:[%s0 + $0x60] sm:$0xff]
  %v26 = vld [vmem:[%s0 + $0x68] sm:$0xff]
  %v27 = vld [vmem:[%s0 + $0x70] sm:$0xff]
  %v28 = vld [vmem:[%s0 + $0x78] sm:$0xff]
  %v29 = vld [vmem:[%s0 + $0x80] sm:$0xf]
  %v30 = vld [vmem:[%s0 + $0x88] sm:$0xf]
  %v31 = vld [vmem:[%s0 + $0x90] sm:$0xf]
  %v32 = vld [vmem:[%s0 + $0x98] sm:$0xf]
  %34 = vset.pattern.permute.xlu0 0
  %35 = vperm.xlu0 %34, %v12
  %v36 = vpop.permute.xlu0 %35
  %vm38 = vcmask 293888
  %v40 = vsel %vm38, %v11, 0
  %vm42 = vcmask 1043456
  %v44 = vsel %vm42, %v29, 0
  %v47 = vsel %vm42, %v30, 0
  %v50 = vsel %vm42, %v31, 0
  %v53 = vsel %vm42, %v32, 0
  %55 = vmatprep.subr.mxu0 %v14
  %56 = vmatpush1.msra.mxu0 %v13
  %57 = vmatprep.subr.mxu0 %v18
  %58 = vmatpush1.msra.mxu0 %v17
  %59 = vmatprep.subr.mxu0 %v22
  %60 = vmatpush1.msra.mxu0 %v21
  %61 = vmatprep.subr.mxu0 %v26
  %62 = vmatpush1.msra.mxu0 %v25
  %63 = vmatprep.subr.mxu0 %v47
  %64 = vmatpush1.msra.mxu0 %v44
  %65 = vmatprep.subr.mxu0 0.0
  %66 = vmatpush1.msra.mxu0 0.0
  %67 = vmatprep.subr.mxu0 0.0
  %68 = vmatpush1.msra.mxu0 0.0
  %69 = vmatprep.subr.mxu0 0.0
  %70 = vmatpush1.msra.mxu0 0.0
  %71 = vmatprep.subr.mxu0 0.0
  %72 = vmatpush1.msra.mxu0 0.0
  %73 = vmatprep.subr.mxu0 0.0
  %74 = vmatpush1.msra.mxu0 0.0
  %75 = vmatprep.subr.mxu0 0.0
  %76 = vmatpush1.msra.mxu0 0.0
  %77 = vmatprep.subr.mxu0 0.0
  %78 = vmatpush1.msra.mxu0 0.0
  %79 = vmatprep.subr.mxu0 0.0
  %80 = vmatpush1.msra.mxu0 0.0
  %81 = vmatprep.subr.mxu0 0.0
  %82 = vmatpush1.msra.mxu0 0.0
  %83 = vmatprep.subr.mxu0 0.0
  %84 = vmatpush1.msra.mxu0 0.0
  %85 = vmatprep.subr.mxu0 0.0
  %86 = vmatpush1.msra.mxu0 0.0
  %87 = vmatprep.subr.mxu0 0.0
  %88 = vmatpush1.msra.mxu0 0.0
  %89 = vmatprep.subr.mxu0 0.0
  %90 = vmatpush1.msra.mxu0 0.0
  %91 = vmatprep.subr.mxu0 0.0
  %92 = vmatpush1.msra.mxu0 0.0
  %93 = vmatprep.subr.mxu0 0.0
  %94 = vmatpush1.msra.mxu0 0.0
  %95 = vmatprep.subr.mxu0 0.0
  %96 = vmatpush1.msra.mxu0 0.0
  %97 = vmatprep.subr.mxu0 0.0
  %98 = vmatpush1.msra.mxu0 0.0
  %99 = vmatprep.subr.mxu0 0.0
  %100 = vmatpush1.msra.mxu0 0.0
  %101 = vmatprep.subr.mxu0 0.0
  %102 = vmatpush1.msra.mxu0 0.0
  %103 = vmatprep.subr.mxu0 0.0
  %104 = vmatpush1.msra.mxu0 0.0
  %105 = vmatprep.subr.mxu0 0.0
  %106 = vmatpush1.msra.mxu0 0.0
  %107 = vmatprep.subr.mxu0 0.0
  %108 = vmatpush1.msra.mxu0 0.0
  %109 = vmatprep.subr.mxu0 0.0
  %110 = vmatpush1.msra.mxu0 0.0
  %111 = vmatprep.subr.mxu0 0.0
  %112 = vmatpush1.msra.mxu0 0.0
  %113 = vmatprep.subr.mxu0 0.0
  %114 = vmatpush1.msra.mxu0 0.0
  %115 = vmatprep.subr.mxu0 0.0
  %116 = vmatpush1.msra.mxu0 0.0
  %117 = vmatprep.subr.mxu0 0.0
  %118 = vmatpush1.msra.mxu0 0.0
  %119 = vmatprep.mubr.f32.mxu0 0.0
  %120 = vmatmul.mubr.f32.gmra.mrb[0].mxu0 %v40
  %v121 = vpop.f32.mrb[0].mxu0
  %v122 = vadd.f32 %v36, %v121
  %v123 = vpop.f32.mrb[0].mxu0
  %v124 = vadd.f32 %v36, %v123
  %125 = vdwg.mxu0
  %126 = vmatprep.subr.mxu0 %v16
  %127 = vmatpush1.msra.mxu0 %v15
  %128 = vmatprep.subr.mxu0 %v20
  %129 = vmatpush1.msra.mxu0 %v19
  %130 = vmatprep.subr.mxu0 %v24
  %131 = vmatpush1.msra.mxu0 %v23
  %132 = vmatprep.subr.mxu0 %v28
  %133 = vmatpush1.msra.mxu0 %v27
  %134 = vmatprep.subr.mxu0 %v53
  %135 = vmatpush1.msra.mxu0 %v50
  %136 = vmatprep.subr.mxu0 0.0
  %137 = vmatpush1.msra.mxu0 0.0
  %138 = vmatprep.subr.mxu0 0.0
  %139 = vmatpush1.msra.mxu0 0.0
  %140 = vmatprep.subr.mxu0 0.0
  %141 = vmatpush1.msra.mxu0 0.0
  %142 = vmatprep.subr.mxu0 0.0
  %143 = vmatpush1.msra.mxu0 0.0
  %144 = vmatprep.subr.mxu0 0.0
  %145 = vmatpush1.msra.mxu0 0.0
  %146 = vmatprep.subr.mxu0 0.0
  %147 = vmatpush1.msra.mxu0 0.0
  %148 = vmatprep.subr.mxu0 0.0
  %149 = vmatpush1.msra.mxu0 0.0
  %150 = vmatprep.subr.mxu0 0.0
  %151 = vmatpush1.msra.mxu0 0.0
  %152 = vmatprep.subr.mxu0 0.0
  %153 = vmatpush1.msra.mxu0 0.0
  %154 = vmatprep.subr.mxu0 0.0
  %155 = vmatpush1.msra.mxu0 0.0
  %156 = vmatprep.subr.mxu0 0.0
  %157 = vmatpush1.msra.mxu0 0.0
  %158 = vmatprep.subr.mxu0 0.0
  %159 = vmatpush1.msra.mxu0 0.0
  %160 = vmatprep.subr.mxu0 0.0
  %161 = vmatpush1.msra.mxu0 0.0
  %162 = vmatprep.subr.mxu0 0.0
  %163 = vmatpush1.msra.mxu0 0.0
  %164 = vmatprep.subr.mxu0 0.0
  %165 = vmatpush1.msra.mxu0 0.0
  %166 = vmatprep.subr.mxu0 0.0
  %167 = vmatpush1.msra.mxu0 0.0
  %168 = vmatprep.subr.mxu0 0.0
  %169 = vmatpush1.msra.mxu0 0.0
  %170 = vmatprep.subr.mxu0 0.0
  %171 = vmatpush1.msra.mxu0 0.0
  %172 = vmatprep.subr.mxu0 0.0
  %173 = vmatpush1.msra.mxu0 0.0
  %174 = vmatprep.subr.mxu0 0.0
  %175 = vmatpush1.msra.mxu0 0.0
  %176 = vmatprep.subr.mxu0 0.0
  %177 = vmatpush1.msra.mxu0 0.0
  %178 = vmatprep.subr.mxu0 0.0
  %179 = vmatpush1.msra.mxu0 0.0
  %180 = vmatprep.subr.mxu0 0.0
  %181 = vmatpush1.msra.mxu0 0.0
  %182 = vmatprep.subr.mxu0 0.0
  %183 = vmatpush1.msra.mxu0 0.0
  %184 = vmatprep.subr.mxu0 0.0
  %185 = vmatpush1.msra.mxu0 0.0
  %186 = vmatprep.subr.mxu0 0.0
  %187 = vmatpush1.msra.mxu0 0.0
  %188 = vmatprep.subr.mxu0 0.0
  %189 = vmatpush1.msra.mxu0 0.0
  %190 = vmatprep.mubr.f32.mxu0 0.0
  %191 = vmatmul.mubr.f32.gmra.mrb[0].mxu0 %v40
  %v192 = vpop.f32.mrb[0].mxu0
  %v193 = vadd.f32 %v36, %v192
  %v194 = vpop.f32.mrb[0].mxu0
  %v195 = vadd.f32 %v36, %v194
  %196 = vdwg.mxu0
  %v197 = vmax.f32 %v122, 0.0
  %v198 = vmax.f32 %v124, 0.0
  %v199 = vmax.f32 %v193, 0.0
  %v200 = vmax.f32 %v195, 0.0
  %v201 = vadd.f32 %v197, %v198
  %202 = vadd.xlane.f32.xlu0 %v201
  %v203 = vpop.xlane.xlu0 %202
  %v204 = vadd.f32 %v199, %v200
  %205 = vadd.xlane.f32.xlu0 %v204
  %v206 = vpop.xlane.xlu0 %205
  %vm207 = vcmask 7168
  %v208 = vsel %vm207, %v203, %v206
  %v209 = vmul.f32 %v208, 0.00390625
  %v210 = vld [vmem:[%s1 + $0x10] sm:$0xff]
  %v211 = vld [vmem:[%s1 + $0x18] sm:$0xff]
  %v212 = vld [vmem:[%s1 + $0x20] sm:$0xff]
  %v213 = vld [vmem:[%s1 + $0x28] sm:$0xff]
  %v214 = vld [vmem:[%s1 + $0x30] sm:$0xff]
  %v215 = vld [vmem:[%s1 + $0x38] sm:$0xff]
  %v216 = vld [vmem:[%s1 + $0x40] sm:$0xff]
  %v217 = vld [vmem:[%s1 + $0x48] sm:$0xff]
  %219 = vset.pattern.permute.xlu0 0
  %220 = vperm.xlu0 %219, %v214
  %v221 = vpop.permute.xlu0 %220
  %224 = vset.pattern.permute.xlu0 0
  %225 = vperm.xlu0 %224, %v215
  %v226 = vpop.permute.xlu0 %225
  %229 = vset.pattern.permute.xlu0 0
  %230 = vperm.xlu0 %229, %v216
  %v231 = vpop.permute.xlu0 %230
  %234 = vset.pattern.permute.xlu0 0
  %235 = vperm.xlu0 %234, %v217
  %v236 = vpop.permute.xlu0 %235
  %vm238 = vcmask 64512
  %v240 = vsel %vm238, %v210, 0
  %v243 = vsel %vm238, %v211, 0
  %v246 = vsel %vm238, %v212, 0
  %v249 = vsel %vm238, %v213, 0
  %251 = vmatprep.subr.mxu0 0.0
  %252 = vmatpush1.msra.mxu0 %v209
  %253 = vmatprep.subr.mxu0 0.0
  %254 = vmatpush1.msra.mxu0 0.0
  %255 = vmatprep.subr.mxu0 0.0
  %256 = vmatpush1.msra.mxu0 0.0
  %257 = vmatprep.subr.mxu0 0.0
  %258 = vmatpush1.msra.mxu0 0.0
  %259 = vmatprep.subr.mxu0 0.0
  %260 = vmatpush1.msra.mxu0 0.0
  %261 = vmatprep.subr.mxu0 0.0
  %262 = vmatpush1.msra.mxu0 0.0
  %263 = vmatprep.subr.mxu0 0.0
  %264 = vmatpush1.msra.mxu0 0.0
  %265 = vmatprep.subr.mxu0 0.0
  %266 = vmatpush1.msra.mxu0 0.0
  %267 = vmatprep.subr.mxu0 0.0
  %268 = vmatpush1.msra.mxu0 0.0
  %269 = vmatprep.subr.mxu0 0.0
  %270 = vmatpush1.msra.mxu0 0.0
  %271 = vmatprep.subr.mxu0 0.0
  %272 = vmatpush1.msra.mxu0 0.0
  %273 = vmatprep.subr.mxu0 0.0
  %274 = vmatpush1.msra.mxu0 0.0
  %275 = vmatprep.subr.mxu0 0.0
  %276 = vmatpush1.msra.mxu0 0.0
  %277 = vmatprep.subr.mxu0 0.0
  %278 = vmatpush1.msra.mxu0 0.0
  %279 = vmatprep.subr.mxu0 0.0
  %280 = vmatpush1.msra.mxu0 0.0
  %281 = vmatprep.subr.mxu0 0.0
  %282 = vmatpush1.msra.mxu0 0.0
  %283 = vmatprep.subr.mxu0 0.0
  %284 = vmatpush1.msra.mxu0 0.0
  %285 = vmatprep.subr.mxu0 0.0
  %286 = vmatpush1.msra.mxu0 0.0
  %287 = vmatprep.subr.mxu0 0.0
  %288 = vmatpush1.msra.mxu0 0.0
  %289 = vmatprep.subr.mxu0 0.0
  %290 = vmatpush1.msra.mxu0 0.0
  %291 = vmatprep.subr.mxu0 0.0
  %292 = vmatpush1.msra.mxu0 0.0
  %293 = vmatprep.subr.mxu0 0.0
  %294 = vmatpush1.msra.mxu0 0.0
  %295 = vmatprep.subr.mxu0 0.0
  %296 = vmatpush1.msra.mxu0 0.0
  %297 = vmatprep.subr.mxu0 0.0
  %298 = vmatpush1.msra.mxu0 0.0
  %299 = vmatprep.subr.mxu0 0.0
  %300 = vmatpush1.msra.mxu0 0.0
  %301 = vmatprep.subr.mxu0 0.0
  %302 = vmatpush1.msra.mxu0 0.0
  %303 = vmatprep.subr.mxu0 0.0
  %304 = vmatpush1.msra.mxu0 0.0
  %305 = vmatprep.subr.mxu0 0.0
  %306 = vmatpush1.msra.mxu0 0.0
  %307 = vmatprep.subr.mxu0 0.0
  %308 = vmatpush1.msra.mxu0 0.0
  %309 = vmatprep.subr.mxu0 0.0
  %310 = vmatpush1.msra.mxu0 0.0
  %311 = vmatprep.subr.mxu0 0.0
  %312 = vmatpush1.msra.mxu0 0.0
  %313 = vmatprep.subr.mxu0 0.0
  %314 = vmatpush1.msra.mxu0 0.0
  %315 = vmatprep.mubr.f32.mxu0 0.0
  %316 = vmatmul.mubr.f32.gmra.mrb[0].mxu0 %v240
  %v317 = vpop.f32.mrb[0].mxu0
  %v318 = vadd.f32 %v221, %v317
  %v319 = vpop.f32.mrb[0].mxu0
  %320 = vmatprep.mubr.f32.mxu0 0.0
  %321 = vmatmul.mubr.f32.gmra.mrb[0].mxu0 %v243
  %v322 = vpop.f32.mrb[0].mxu0
  %v323 = vadd.f32 %v226, %v322
  %v324 = vpop.f32.mrb[0].mxu0
  %325 = vmatprep.mubr.f32.mxu0 0.0
  %326 = vmatmul.mubr.f32.gmra.mrb[0].mxu0 %v246
  %v327 = vpop.f32.mrb[0].mxu0
  %v328 = vadd.f32 %v231, %v327
  %v329 = vpop.f32.mrb[0].mxu0
  %330 = vmatprep.mubr.f32.mxu0 0.0
  %331 = vmatmul.mubr.f32.gmra.mrb[0].mxu0 %v249
  %v332 = vpop.f32.mrb[0].mxu0
  %v333 = vadd.f32 %v236, %v332
  %v334 = vpop.f32.mrb[0].mxu0
  %335 = vdwg.mxu0
  %v336 = vmax.f32 %v318, 0.0
  %v337 = vmax.f32 %v323, 0.0
  %v338 = vmax.f32 %v328, 0.0
  %v339 = vmax.f32 %v333, 0.0
  %v340 = vld [vmem:[%s1 + $0x50] sm:$0x1]
  %v341 = vld [vmem:[%s1 + $0x58] sm:$0x1]
  %343 = vset.pattern.permute.xlu0 0
  %344 = vperm.xlu0 %343, %v341
  %v345 = vpop.permute.xlu0 %344
  %vm347 = vcmask 261120
  %v349 = vsel %vm347, %v340, 0
  %351 = vmatprep.subr.mxu0 0.0
  %352 = vmatpush1.msra.mxu0 %v336
  %353 = vmatprep.subr.mxu0 0.0
  %354 = vmatpush1.msra.mxu0 %v337
  %355 = vmatprep.subr.mxu0 0.0
  %356 = vmatpush1.msra.mxu0 %v338
  %357 = vmatprep.subr.mxu0 0.0
  %358 = vmatpush1.msra.mxu0 %v339
  %359 = vmatprep.subr.mxu0 0.0
  %360 = vmatpush1.msra.mxu0 0.0
  %361 = vmatprep.subr.mxu0 0.0
  %362 = vmatpush1.msra.mxu0 0.0
  %363 = vmatprep.subr.mxu0 0.0
  %364 = vmatpush1.msra.mxu0 0.0
  %365 = vmatprep.subr.mxu0 0.0
  %366 = vmatpush1.msra.mxu0 0.0
  %367 = vmatprep.subr.mxu0 0.0
  %368 = vmatpush1.msra.mxu0 0.0
  %369 = vmatprep.subr.mxu0 0.0
  %370 = vmatpush1.msra.mxu0 0.0
  %371 = vmatprep.subr.mxu0 0.0
  %372 = vmatpush1.msra.mxu0 0.0
  %373 = vmatprep.subr.mxu0 0.0
  %374 = vmatpush1.msra.mxu0 0.0
  %375 = vmatprep.subr.mxu0 0.0
  %376 = vmatpush1.msra.mxu0 0.0
  %377 = vmatprep.subr.mxu0 0.0
  %378 = vmatpush1.msra.mxu0 0.0
  %379 = vmatprep.subr.mxu0 0.0
  %380 = vmatpush1.msra.mxu0 0.0
  %381 = vmatprep.subr.mxu0 0.0
  %382 = vmatpush1.msra.mxu0 0.0
  %383 = vmatprep.subr.mxu0 0.0
  %384 = vmatpush1.msra.mxu0 0.0
  %385 = vmatprep.subr.mxu0 0.0
  %386 = vmatpush1.msra.mxu0 0.0
  %387 = vmatprep.subr.mxu0 0.0
  %388 = vmatpush1.msra.mxu0 0.0
  %389 = vmatprep.subr.mxu0 0.0
  %390 = vmatpush1.msra.mxu0 0.0
  %391 = vmatprep.subr.mxu0 0.0
  %392 = vmatpush1.msra.mxu0 0.0
  %393 = vmatprep.subr.mxu0 0.0
  %394 = vmatpush1.msra.mxu0 0.0
  %395 = vmatprep.subr.mxu0 0.0
  %396 = vmatpush1.msra.mxu0 0.0
  %397 = vmatprep.subr.mxu0 0.0
  %398 = vmatpush1.msra.mxu0 0.0
  %399 = vmatprep.subr.mxu0 0.0
  %400 = vmatpush1.msra.mxu0 0.0
  %401 = vmatprep.subr.mxu0 0.0
  %402 = vmatpush1.msra.mxu0 0.0
  %403 = vmatprep.subr.mxu0 0.0
  %404 = vmatpush1.msra.mxu0 0.0
  %405 = vmatprep.subr.mxu0 0.0
  %406 = vmatpush1.msra.mxu0 0.0
  %407 = vmatprep.subr.mxu0 0.0
  %408 = vmatpush1.msra.mxu0 0.0
  %409 = vmatprep.subr.mxu0 0.0
  %410 = vmatpush1.msra.mxu0 0.0
  %411 = vmatprep.subr.mxu0 0.0
  %412 = vmatpush1.msra.mxu0 0.0
  %413 = vmatprep.subr.mxu0 0.0
  %414 = vmatpush1.msra.mxu0 0.0
  %415 = vmatprep.mubr.f32.mxu0 0.0
  %416 = vmatmul.mubr.f32.gmra.mrb[0].mxu0 %v349
  %v417 = vpop.f32.mrb[0].mxu0
  %v418 = vadd.f32 %v345, %v417
  %v419 = vpop.f32.mrb[0].mxu0
  %420 = vdwg.mxu0
  %vm421 = vcmask 15360
  %v422 = vsel %vm421, %v418, 0.0
  %vm423 = vcmask 1040384
  %v424 = vsel %vm423, %v422, 0.0
  %v425 = vld [vmem:[%s1 + $0x60] sm:$0x1]
  %v426 = vsub.f32 %v418, %v425
  %v427 = vmul.f32 %v426, %v426
  %vm428 = vcmask 8192
  %v429 = vsel %vm428, %v427, 0.0
  %430 = vadd.xlane.f32.xlu0 %v429
  %v431 = vpop.xlane.xlu0 %430
  %v432 = vadd.f32 %v431, 0.0
  %v433 = vmul.f32 %v432, 0.5
  %v434 = vlaneseq
  %v435 = vand.u32 %v434, 127
  %vm436 = vcmp.ge.s32.totalorder %v435, 64
  %v437 = vlaneseq
  %v438 = vshrl.u32 %v437, 7
  %v439 = vsub.s32 0, %v438
  %v440 = vrot.slane %v433, %v439
  %v441 = vsel %vm436, %v440, %v424
  %442 = vst [vmem:[%s2] sm:$0xff] %v441
  // Predicated region
  $region10: #{_forward_jit.1} parent=0 // pred_check
    _
  $region11: #{_forward_jit.1} parent=0 // pred_check_branch
    %444 = sbr.rel (0) target = $region13
  $region12: #{_forward_jit.1} parent=0 // pred_region
    _
  $region13: #{_forward_jit.1} parent=0 // pred_fallthru
    _
  // Predicated region
  $region14: #{_forward_jit.1} parent=0 // pred_check
    _
  $region15: #{_forward_jit.1} parent=0 // pred_check_branch
    %446 = sbr.rel (0) target = $region17
  $region16: #{_forward_jit.1} parent=0 // pred_region
    _
  $region17: #{_forward_jit.1} parent=0 // pred_fallthru
    _

</llo_original>
